<compile_context>
chip_gen: v7x
topology: tpu7x:2x2x1
jax: 0.10.0
libtpu: 0.0.40
codegen_flags: <defaults>
</compile_context>

<pallas_src>
import math
import functools

import jax
import jax.numpy as jnp
from jax import lax
from jax.experimental import pallas as pl
from jax.experimental.pallas import tpu as pltpu


def _cdiv(a: int, b: int) -> int:
    return -(-a // b)


# --------------------------------------------------------------------------------------
# Parameter ("buffer") setup — deterministic, mirrors PositionalEncoder.__init__
# --------------------------------------------------------------------------------------
def make_positional_encodings(max_seq_len: int, embedding_dim: int) -> jnp.ndarray:
    """[max_seq_len, embedding_dim] float32, same values as the PyTorch buffer."""
    positions = jnp.arange(max_seq_len, dtype=jnp.float32)[:, None]            # [S, 1]
    mult = jnp.exp(
        jnp.arange(0, embedding_dim, 2, dtype=jnp.float32)
        * (-math.log(10000.0) / embedding_dim)
    )                                                                          # [ceil(E/2)]
    pe = jnp.zeros((max_seq_len, embedding_dim), dtype=jnp.float32)
    pe = pe.at[:, 0::2].set(jnp.sin(positions * mult))
    pe = pe.at[:, 1::2].set(jnp.cos(positions * mult[: embedding_dim // 2]))   # odd-E safe
    return pe


# --------------------------------------------------------------------------------------
# Pallas kernel: y = dropout(x + PE), fused elementwise hot path (lane-dense 2-D blocks)
# --------------------------------------------------------------------------------------
def _pe_dropout_kernel(seed_ref, x_ref, pe_ref, o_ref, *, batch: int, embed: int,
                       p: float, training: bool):
    # x_ref/o_ref: [ts, B*E]; pe_ref: [ts, E]; seed_ref: SMEM (1,) int32
    pe_tile = pe_ref[...]                                    # small [ts, E] f32 tile
    rows, cols_total = x_ref.shape                           # cols_total == batch * embed

    apply_dropout = training and (0.0 < p < 1.0)
    drop_all = training and (p >= 1.0)

    if apply_dropout:
        # Hoisted, batch-independent pieces of the stateless counter hash.  Index math stays
        # in int32 (the final int32->uint32 view is bit-identical / free), keyed on the
        # absolute element index in the [S, B*E] layout + seed -> mask is tiling-independent.
        row0 = pl.program_id(0) * rows                                         # int32 scalar
        r = lax.broadcasted_iota(jnp.int32, (rows, embed), 0)
        c = lax.broadcasted_iota(jnp.int32, (rows, embed), 1)
        idx_base = (row0 + r) * cols_total + c                                 # batch-0 slice
        seed_term = seed_ref[0].astype(jnp.uint32) * jnp.uint32(0x85EBCA77)
        thresh = jnp.uint32(min(int(round(p * float(1 << 32))), (1 << 32) - 1))
        scale = jnp.float32(1.0 / (1.0 - p))

    # Static unroll over batch slices: PE broadcast across the batch comes for free via the
    # slice loop — no [ts, B*E] PE temporary is ever materialized.
    for b in range(batch):
        sl = slice(b * embed, (b + 1) * embed)
        y = x_ref[:, sl].astype(jnp.float32) + pe_tile                         # [ts, E]
        if drop_all:
            y = jnp.zeros_like(y)
        elif apply_dropout:
            h = (idx_base + b * embed).astype(jnp.uint32)
            h = h * jnp.uint32(0x9E3779B1) + seed_term
            h = h ^ (h >> jnp.uint32(16))
            h = h * jnp.uint32(0x85EBCA6B)
            h = h ^ (h >> jnp.uint32(13))
            keep = h >= thresh                                                 # P(keep) ~= 1-p
            y = jnp.where(keep, y * scale, jnp.float32(0.0))
        o_ref[:, sl] = y.astype(o_ref.dtype)


def _pick_seq_tile(seq_len: int, row_bytes: int, *, align: int = 8,
                   target_bytes: int = 4 * 1024 * 1024) -> int:
    """Largest `align`-aligned sequence tile targeting ~target_bytes per (larger of in/out)
    block, additionally capped so the grid has >=2 blocks whenever the sequence is splittable
    on `align` boundaries (keeps both v7x TensorCores busy)."""
    cap = max(align, (target_bytes // max(row_bytes, 1)) // align * align)
    half = align * _cdiv(_cdiv(seq_len, 2), align)
    ts = min(cap, half)
    if ts >= seq_len:
        return seq_len          # single block; block dim == full array dim -> compliant
    return ts                   # aligned tile; last grid block may be partial (masked)


def positional_encoder_forward(
    x: jnp.ndarray,
    pe: jnp.ndarray,
    *,
    dropout_p: float = 0.1,
    training: bool = False,
    batch_first: bool = False,
    seed: int = 0,
    out_dtype=None,
) -> jnp.ndarray:
    """Forward pass of PositionalEncoder. Output shape is always [S, B, E]."""
    max_seq_len, embedding_dim = pe.shape

    assert x.shape[-1] == embedding_dim, (
        "the embedding size is not correct. expected %d, got %d"
        % (embedding_dim, x.shape[-1])
    )
    if batch_first:
        assert x.shape[1] == max_seq_len, (
            " max_seq_len is of incorrect size for batch_first = True. Expected %d, got %d"
            % (max_seq_len, x.shape[1])
        )
        # TODO(synk): batch_first still pays one wrapper transpose ([B,S,E]->[S,B,E]); removing
        # it needs a transposed (strided) out-BlockSpec store since the module output must stay
        # [S,B,E], which is only lane-dense when E % 128 == 0.
        x = jnp.transpose(x, (1, 0, 2))
    else:
        assert x.shape[0] == max_seq_len, (
            " max_seq_len is of incorrect size for batch_first = False. Expected %d, got %d"
            % (max_seq_len, x.shape[0])
        )

    S, B, E = x.shape
    BE = B * E
    if out_dtype is None:
        out_dtype = jnp.promote_types(x.dtype, pe.dtype)      # torch promotion (bf16-safe)
    in_item = jnp.dtype(x.dtype).itemsize
    out_item = jnp.dtype(out_dtype).itemsize

    # Size tiles against the larger of the (double-buffered) input/output blocks, aligned to
    # the sublane tile of the narrowest dtype (8 rows f32, 16 bf16, 32 int8/fp8).
    row_bytes = BE * max(in_item, out_item)
    align = max(8, 32 // max(1, min(in_item, out_item)))
    ts = _pick_seq_tile(S, row_bytes, align=align)
    grid = (_cdiv(S, ts),)

    # NOTE: fully unmasked (lane-dense) stores require B*E % 128 == 0; smaller widths use
    # masked partial stores (correct, slower).
    x2 = x.reshape(S, BE)                                     # free reshape; lane-dense layout
    seed_arr = jnp.array([seed], dtype=jnp.int32)
    kernel = functools.partial(
        _pe_dropout_kernel, batch=B, embed=E, p=float(dropout_p), training=bool(training))

    out2 = pl.pallas_call(
        kernel,
        out_shape=jax.ShapeDtypeStruct((S, BE), out_dtype),
        grid_spec=pltpu.PrefetchScalarGridSpec(
            num_scalar_prefetch=1,                            # seed lands in SMEM
            grid=grid,
            in_specs=[
                pl.BlockSpec((ts, BE), lambda i, seed_ref: (i, 0)),   # x (flattened)
                pl.BlockSpec((ts, E), lambda i, seed_ref: (i, 0)),    # PE (small, once total)
            ],
            out_specs=pl.BlockSpec((ts, BE), lambda i, seed_ref: (i, 0)),
        ),
        compiler_params=pltpu.CompilerParams(
            dimension_semantics=("parallel",),                # stateless RNG -> megacore-safe
            vmem_limit_bytes=40 * 1024 * 1024,                # safe on v7x (64 MiB VMEM)
        ),
    )(seed_arr, x2, pe)
    return out2.reshape(S, B, E)


# --------------------------------------------------------------------------------------
# Demo / self-test
# --------------------------------------------------------------------------------------
if __name__ == "__main__":
    # --- small config matching the module defaults ---
    max_seq_len = 8
    batch = 2
    embedding_dim = 32
    dropout_p = 0.1

    key = jax.random.PRNGKey(0)
    x_sbe = jax.random.normal(key, (max_seq_len, batch, embedding_dim), dtype=jnp.float32)
    pe = make_positional_encodings(max_seq_len, embedding_dim)
    ref = x_sbe + pe[:, None, :]

    # Eval mode (dropout is identity) — matches x + PE exactly.
    y_eval = positional_encoder_forward(
        x_sbe, pe, dropout_p=dropout_p, training=False, batch_first=False)
    y_eval = jax.block_until_ready(y_eval)
    assert y_eval.shape == (max_seq_len, batch, embedding_dim)
    assert jnp.allclose(y_eval, ref, atol=1e-6, rtol=1e-6)

    # Train mode (in-kernel inverted dropout via stateless hash RNG).
    y_train = positional_encoder_forward(
        x_sbe, pe, dropout_p=dropout_p, training=True, batch_first=False, seed=123)
    y_train = jax.block_until_ready(y_train)
    assert y_train.shape == (max_seq_len, batch, embedding_dim)
    scaled_ref = ref / (1.0 - dropout_p)
    ok = jnp.logical_or(jnp.isclose(y_train, scaled_ref, atol=1e-5), y_train == 0.0)
    assert bool(jnp.all(ok))
    n_zero = int(jnp.sum(y_train == 0.0))
    assert 0 < n_zero < y_train.size // 2   # some (but not most) elements dropped at p=0.1

    # batch_first=True path: input [B, S, E], output still [S, B, E].
    x_bse = jnp.transpose(x_sbe, (1, 0, 2))
    y_bf = positional_encoder_forward(
        x_bse, pe, dropout_p=dropout_p, training=False, batch_first=True)
    y_bf = jax.block_until_ready(y_bf)
    assert y_bf.shape == (max_seq_len, batch, embedding_dim)
    assert jnp.allclose(y_bf, ref, atol=1e-6, rtol=1e-6)

    # --- second config exercising a multi-block grid (>=2 for megacore) + partial last block,
    #     with a lane-dense B*E multiple of 128 ---
    S2, B2, E2 = 24, 3, 128
    key2 = jax.random.PRNGKey(0)
    x2_sbe = jax.random.normal(key2, (S2, B2, E2), dtype=jnp.float32)
    pe2 = make_positional_encodings(S2, E2)
    ref2 = x2_sbe + pe2[:, None, :]
    y2 = positional_encoder_forward(x2_sbe, pe2, dropout_p=dropout_p, training=False)
    y2 = jax.block_until_ready(y2)
    assert y2.shape == (S2, B2, E2)
    assert jnp.allclose(y2, ref2, atol=1e-6, rtol=1e-6)
    y2t = positional_encoder_forward(x2_sbe, pe2, dropout_p=dropout_p, training=True, seed=7)
    y2t = jax.block_until_ready(y2t)
    ok2 = jnp.logical_or(jnp.isclose(y2t, ref2 / (1.0 - dropout_p), atol=1e-5), y2t == 0.0)
    assert bool(jnp.all(ok2))

    print("KERNEL_OK")
</pallas_src>

<mosaic_0001>
module attributes {stable_mosaic.version = 11 : i64} {
  func.func @_pe_dropout_kernel(%arg0: i32, %arg1: memref<1xi32, #tpu.memory_space<smem>>, %arg2: memref<8x64xf32, #tpu.memory_space<vmem>>, %arg3: memref<8x32xf32, #tpu.memory_space<vmem>>, %arg4: memref<8x64xf32, #tpu.memory_space<vmem>>) attributes {dimension_semantics = [#tpu.dimension_semantics<parallel>], iteration_bounds = array<i64: 1>, scalar_prefetch = 1 : i64, scratch_operands = 0 : i64, tpu.core_type = #tpu.core_type<tc>, window_params = [{transform_indices = @transform_0, window_bounds = array<i64: 8, 64>}, {transform_indices = @transform_1, window_bounds = array<i64: 8, 32>}, {transform_indices = @transform_2, window_bounds = array<i64: 8, 64>}]} {
    %c0 = arith.constant 0 : index
    %c0_0 = arith.constant 0 : index
    %0 = vector.load %arg3[%c0, %c0_0] : memref<8x32xf32, #tpu.memory_space<vmem>>, vector<8x32xf32>
    %c0_1 = arith.constant 0 : index
    %c0_2 = arith.constant 0 : index
    %1 = vector.load %arg2[%c0_1, %c0_2] : memref<8x64xf32, #tpu.memory_space<vmem>>, vector<8x32xf32>
    %2 = arith.addf %1, %0 : vector<8x32xf32>
    %c0_3 = arith.constant 0 : index
    %c0_4 = arith.constant 0 : index
    %3 = vector.load %arg4[%c0_3, %c0_4] : memref<8x64xf32, #tpu.memory_space<vmem>>, vector<8x32xf32>
    tpu.vector_store %arg4[%c0_3, %c0_4], %2 {strides = array<i32>} : memref<8x64xf32, #tpu.memory_space<vmem>>, vector<8x32xf32>,
    %c0_5 = arith.constant 0 : index
    %c32 = arith.constant 32 : index
    %4 = vector.load %arg2[%c0_5, %c32] : memref<8x64xf32, #tpu.memory_space<vmem>>, vector<8x32xf32>
    %5 = arith.addf %4, %0 : vector<8x32xf32>
    %c0_6 = arith.constant 0 : index
    %c32_7 = arith.constant 32 : index
    %6 = vector.load %arg4[%c0_6, %c32_7] : memref<8x64xf32, #tpu.memory_space<vmem>>, vector<8x32xf32>
    tpu.vector_store %arg4[%c0_6, %c32_7], %5 {strides = array<i32>} : memref<8x64xf32, #tpu.memory_space<vmem>>, vector<8x32xf32>,
    return
  }
  func.func @transform_0(%arg0: i32, %arg1: memref<1xi32, #tpu.memory_space<smem>>) -> (i32, i32) {
    %c0_i32 = arith.constant 0 : i32
    %c0_i32_0 = arith.constant 0 : i32
    return %arg0, %c0_i32 : i32, i32
  }
  func.func @transform_1(%arg0: i32, %arg1: memref<1xi32, #tpu.memory_space<smem>>) -> (i32, i32) {
    %c0_i32 = arith.constant 0 : i32
    %c0_i32_0 = arith.constant 0 : i32
    return %arg0, %c0_i32 : i32, i32
  }
  func.func @transform_2(%arg0: i32, %arg1: memref<1xi32, #tpu.memory_space<smem>>) -> (i32, i32) {
    %c0_i32 = arith.constant 0 : i32
    %c0_i32_0 = arith.constant 0 : i32
    return %arg0, %c0_i32 : i32, i32
  }
}

</mosaic_0001>

<llo_original>
// kernel: tpu_custom_call.1
$region0: #{tpu_custom_call.1}
  #allocation0 [shape = 'u32[]', space=smem, size = 0x4, offset = 0x4, fixed_abs, tag = 'smem constant byte address 0x4 - core index']
  #allocation1 [shape = 'u32[144,128]{1,0:T(1,128)}', space=vmem, size = 0x12000, scoped, tag = 'internal scratch']
  #allocation2 [shape = 's32[1]{0}', space=sflag, size = 0x4, scoped, tag = 'scoped memory for tpu_custom_call.1']
  #allocation3 [shape = 's32[1]{0:T(128)S(6)}', space=smem, size = 0x200, scoped, tag = 'prefetched SMEM operand 0']
  %s0 = inlined_call_operand.<no memory space> [shape: s32[1], index: 0, kind: input, shape index: {}]
  %s1 = inlined_call_operand.hbm [shape: f32[8,64], index: 1, kind: input, shape index: {}]
  %s2 = inlined_call_operand.hbm [shape: f32[8,32], index: 2, kind: input, shape index: {}]
  %s3 = inlined_call_operand.hbm [shape: f32[8,64], index: 3, kind: output, shape index: {}]
  %s4 = sld [smem:[#allocation0]]
  $region26: #{tpu_custom_call.1} parent=0
    _
  %s6 = ssub.s32 1, %s4
  %s7 = scalar_select 0, %s6, %s4
  %8 = sst [smem:[#allocation3]] %s0
  $region1: #{tpu_custom_call.1} parent=0
    #allocation4 [shape = 'u8[4096]{0}', space=vmem, size = 0x1000, scoped, tag = 'input window, operand 1, single buffered']
    #allocation5 [shape = 's32[1]{0}', space=sflag, size = 0x4, scoped, tag = 'scoped memory for tpu_custom_call.1']
    #allocation6 [shape = 's32[1]{0}', space=sflag, size = 0x4, scoped, tag = 'scoped memory for tpu_custom_call.1']
    #allocation7 [shape = 'u8[4096]{0}', space=vmem, size = 0x1000, scoped, tag = 'input window, operand 2, single buffered']
    #allocation8 [shape = 's32[1]{0}', space=sflag, size = 0x4, scoped, tag = 'scoped memory for tpu_custom_call.1']
    #allocation9 [shape = 'u8[4096]{0}', space=vmem, size = 0x1000, scoped, tag = 'output window, operand 0, single buffered']
    %9 = vsyncpa [#allocation5], 0
    %10 = vsyncpa [#allocation8], 0
    %11 = vsyncpa [#allocation6], 0
    // Predicated region
    $region2: #{tpu_custom_call.1} parent=1 // pred_check
      _
    $region3: #{tpu_custom_call.1} parent=1 // pred_check_branch
      %13 = sbr.rel (0) target = $region5
    $region4: #{tpu_custom_call.1} parent=1 // pred_region
      %s15 = ssub.s32 128, 128
      %16 = vsyncadd [#allocation5], %s15
      %s18 = sshll.u32 [#allocation4], 4
      %s19 = int_to_ptr.vmem [resolvable:$true] %s18
      %21 = dma.hbm_to_vmem [thread:$0]  %s1, 128, %s19, [#allocation5]
    $region5: #{tpu_custom_call.1} parent=1 // pred_fallthru
      _
    // Predicated region
    $region6: #{tpu_custom_call.1} parent=1 // pred_check
      _
    $region7: #{tpu_custom_call.1} parent=1 // pred_check_branch
      %23 = sbr.rel (0) target = $region9
    $region8: #{tpu_custom_call.1} parent=1 // pred_region
      %s25 = ssub.s32 128, 128
      %26 = vsyncadd [#allocation8], %s25
      %s28 = sshll.u32 [#allocation7], 4
      %s29 = int_to_ptr.vmem [resolvable:$true] %s28
      %31 = dma.hbm_to_vmem [thread:$0]  %s2, 128, %s29, [#allocation8]
    $region9: #{tpu_custom_call.1} parent=1 // pred_fallthru
      _
    // Predicated region
    $region10: #{tpu_custom_call.1} parent=1 // pred_check
      _
    $region11: #{tpu_custom_call.1} parent=1 // pred_check_branch
      %33 = sbr.rel (0) target = $region13
    $region12: #{tpu_custom_call.1} parent=1 // pred_region
      %34 = dma.done [#allocation5], 128
    $region13: #{tpu_custom_call.1} parent=1 // pred_fallthru
      _
    // Predicated region
    $region14: #{tpu_custom_call.1} parent=1 // pred_check
      _
    $region15: #{tpu_custom_call.1} parent=1 // pred_check_branch
      %36 = sbr.rel (0) target = $region17
    $region16: #{tpu_custom_call.1} parent=1 // pred_region
      %37 = dma.done [#allocation8], 128
    $region17: #{tpu_custom_call.1} parent=1 // pred_fallthru
      _
    %v38 = vld [vmem:[#allocation7] sm:$0xff]
    %v39 = vld [vmem:[#allocation4] sm:$0xff]
    %v40 = vadd.f32 %v39, %v38
    %vm41 = vcmask 261120
    %42 = vst.msk [vmem:[#allocation9] sm:$0xff] %vm41, %v40
    %v43 = vld [vmem:[#allocation4] sm:$0xff]
    %45 = vrot.lane.b32.xlu0 %v38, 32
    %v46 = vpop.permute.xlu0 %45
    %v48 = vadd.f32 %v43, %v46
    %vm49 = vcmask 523520
    %50 = vst.msk [vmem:[#allocation9] sm:$0xff] %vm49, %v48
    // Predicated region
    $region18: #{tpu_custom_call.1} parent=1 // pred_check
      _
    $region19: #{tpu_custom_call.1} parent=1 // pred_check_branch
      %52 = sbr.rel (0) target = $region21
    $region20: #{tpu_custom_call.1} parent=1 // pred_region
      %s54 = ssub.s32 128, 128
      %55 = vsyncadd [#allocation6], %s54
      %s57 = sshll.u32 [#allocation9], 4
      %s58 = int_to_ptr.vmem [resolvable:$true] %s57
      %60 = dma.vmem_to_hbm [thread:$0]  %s58, 128, %s3, [#allocation6]
    $region21: #{tpu_custom_call.1} parent=1 // pred_fallthru
      _
    // Predicated region
    $region22: #{tpu_custom_call.1} parent=1 // pred_check
      _
    $region23: #{tpu_custom_call.1} parent=1 // pred_check_branch
      %62 = sbr.rel (0) target = $region25
    $region24: #{tpu_custom_call.1} parent=1 // pred_region
      %63 = dma.done [#allocation6], 128
    $region25: #{tpu_custom_call.1} parent=1 // pred_fallthru
      _
    %64 = vsyncpa [#allocation5], 1
    %65 = vsyncpa [#allocation8], 1
    %66 = vsyncpa [#allocation6], 1

</llo_original>
